<compile_context>
chip_gen: v5e
topology: v5e:2x2
jax: 0.10.0
libtpu: 0.0.40
codegen_flags: <defaults>
</compile_context>

<pallas_src>
import functools

import jax
import jax.numpy as jnp
from jax import lax
from jax.experimental import pallas as pl
from jax.experimental.pallas import tpu as pltpu


def _round_up(v, mult):
    return (v + mult - 1) // mult * mult


def _vmem_limit_bytes():
    # ~75% of physical VMEM (64 MiB v7x, 128 MiB v5e/v6e), with a safe fallback.
    try:
        cap = pltpu.get_tpu_info().vmem_capacity_bytes
    except Exception:
        cap = 64 * 1024 * 1024
    return int(cap * 3 // 4)


def _wnorm_kernel(w_ref, o_ref, *, maxnorm):
    # weight.renorm(2, dim=1, maxnorm).mul(1/maxnorm):
    # columns with norm > maxnorm become unit norm, smaller columns just get
    # scaled by 1/maxnorm  ->  w_col / max(||w_col||, maxnorm).
    w = w_ref[...].astype(jnp.float32)                                 # (D, bC)
    norm = jnp.sqrt(jnp.sum(w * w, axis=0, keepdims=True))             # (1, bC)
    o_ref[...] = (w / jnp.maximum(norm, maxnorm)).astype(o_ref.dtype)


def _am_kernel(x_ref, w_ref, label_ref, loss_ref, corr_ref,
               xh_ref, m_ref, l_ref, t_ref, bc_ref, bi_ref, *,
               margin, scale, n_cls, n_rows, blk_b, blk_c):
    b = pl.program_id(0)
    c = pl.program_id(1)
    n_c = pl.num_programs(1)

    # Per-B-tile init: normalize x once (F.normalize, eps=1e-12) and reset the
    # online-softmax / running-argmax accumulators.
    @pl.when(c == 0)
    def _():
        x = x_ref[...].astype(jnp.float32)                             # (bB, D)
        norm = jnp.sqrt(jnp.sum(x * x, axis=1, keepdims=True))         # (bB, 1)
        xh_ref[...] = (x / jnp.maximum(norm, 1e-12)).astype(xh_ref.dtype)
        m_ref[...] = jnp.full_like(m_ref, -jnp.inf)
        l_ref[...] = jnp.zeros_like(l_ref)
        t_ref[...] = jnp.zeros_like(t_ref)
        bc_ref[...] = jnp.full_like(bc_ref, -jnp.inf)
        bi_ref[...] = jnp.zeros_like(bi_ref)

    # cos_theta tile on the MXU: (bB, D) @ (D, bC), f32 accumulate.
    cos = jnp.dot(xh_ref[...], w_ref[...], preferred_element_type=jnp.float32)
    cos = jnp.clip(cos, -1.0, 1.0)                                     # (bB, bC)

    label = label_ref[...]                                             # (bB, 1) i32
    cls_id = c * blk_c + lax.broadcasted_iota(jnp.int32, cos.shape, 1)
    valid_c = cls_id < n_cls                                           # mask padded classes
    is_tgt = (cls_id == label) & valid_c

    # Adjusted logits in one fused pass: s*cos, minus s*m on the target column.
    adjust = scale * cos - (scale * margin) * is_tgt.astype(jnp.float32)
    adjust = jnp.where(valid_c, adjust, jnp.float32(-1e30))

    # Online softmax (running max / exp-sum) across class tiles.
    m_prev = m_ref[...]
    m_new = jnp.maximum(m_prev, jnp.max(adjust, axis=1, keepdims=True))
    l_ref[...] = (l_ref[...] * jnp.exp(m_prev - m_new)
                  + jnp.sum(jnp.exp(adjust - m_new), axis=1, keepdims=True))
    m_ref[...] = m_new

    # Target logit shows up in exactly one class tile per row.
    t_ref[...] += jnp.sum(jnp.where(is_tgt, adjust, 0.0), axis=1, keepdims=True)

    # Running argmax over cos_theta (accuracy uses cos_theta, not margin logits).
    cos_m = jnp.where(valid_c, cos, jnp.float32(-2.0))
    tile_best = jnp.max(cos_m, axis=1, keepdims=True)
    tile_idx = jnp.min(jnp.where(cos_m == tile_best, cls_id, jnp.int32(2 ** 30)),
                       axis=1, keepdims=True)
    better = tile_best > bc_ref[...]
    bi_ref[...] = jnp.where(better, tile_idx, bi_ref[...])
    bc_ref[...] = jnp.maximum(bc_ref[...], tile_best)

    # Finalize on the last class tile: per-example CE loss and correctness,
    # with padded batch rows masked out.
    @pl.when(c == n_c - 1)
    def _():
        row = b * blk_b + lax.broadcasted_iota(jnp.int32, (blk_b, 1), 0)
        valid_r = (row < n_rows).astype(jnp.float32)
        lse = m_ref[...] + jnp.log(l_ref[...])
        loss_ref[...] = (lse - t_ref[...]) * valid_r
        corr_ref[...] = (bi_ref[...] == label).astype(jnp.float32) * valid_r


def am_linear_forward(x, weight, labels, *, m, s=30.0,
                      block_b=256, block_c=512,
                      compute_dtype=jnp.float32):
    """AMLinear forward. Returns (loss, acc_percent) as f32 device scalars.

    On v6e/v7x pass compute_dtype=jnp.bfloat16 to halve weight-stream bytes and
    double MXU throughput (norms / softmax math stay in f32).
    """
    B, D = x.shape
    Dw, C = weight.shape
    assert Dw == D, (Dw, D)

    d_pad = _round_up(D, 128)
    blk_b = min(int(block_b), _round_up(B, 8))
    blk_c = min(int(block_c), _round_up(C, 128))
    b_pad = _round_up(B, blk_b)
    c_pad = _round_up(C, blk_c)
    n_b = b_pad // blk_b
    n_c = c_pad // blk_c

    x_p = jnp.zeros((b_pad, d_pad), jnp.float32).at[:B, :D].set(x.astype(jnp.float32))
    w_p = jnp.zeros((d_pad, c_pad), jnp.float32).at[:D, :C].set(weight.astype(jnp.float32))
    lab_p = jnp.zeros((b_pad, 1), jnp.int32).at[:B, 0].set(labels.astype(jnp.int32))

    vmem_limit = _vmem_limit_bytes()

    # --- 1) column-normalize the weight once (hoisted out of the batch loop) ---
    w_hat = pl.pallas_call(
        functools.partial(_wnorm_kernel, maxnorm=1e-5),
        out_shape=jax.ShapeDtypeStruct((d_pad, c_pad), compute_dtype),
        grid=(n_c,),
        in_specs=[pl.BlockSpec((d_pad, blk_c), lambda c: (0, c))],
        out_specs=pl.BlockSpec((d_pad, blk_c), lambda c: (0, c)),
        compiler_params=pltpu.CompilerParams(
            dimension_semantics=("parallel",),
            vmem_limit_bytes=vmem_limit),
    )(w_p)

    # --- 2) tiled AM-softmax forward with online softmax over class tiles ---
    kernel = functools.partial(
        _am_kernel, margin=float(m), scale=float(s),
        n_cls=C, n_rows=B, blk_b=blk_b, blk_c=blk_c)

    grid_spec = pltpu.PrefetchScalarGridSpec(
        num_scalar_prefetch=0,
        grid=(n_b, n_c),
        in_specs=[
            pl.BlockSpec((blk_b, d_pad), lambda b, c: (b, 0)),   # x rows
            pl.BlockSpec((d_pad, blk_c), lambda b, c: (0, c)),   # normalized weight
            pl.BlockSpec((blk_b, 1), lambda b, c: (b, 0)),       # labels
        ],
        out_specs=[
            pl.BlockSpec((blk_b, 1), lambda b, c: (b, 0)),       # per-example loss
            pl.BlockSpec((blk_b, 1), lambda b, c: (b, 0)),       # per-example correct
        ],
        scratch_shapes=[
            pltpu.VMEM((blk_b, d_pad), compute_dtype),  # x_hat (computed once per B tile)
            pltpu.VMEM((blk_b, 1), jnp.float32),        # running max
            pltpu.VMEM((blk_b, 1), jnp.float32),        # running exp-sum
            pltpu.VMEM((blk_b, 1), jnp.float32),        # target logit
            pltpu.VMEM((blk_b, 1), jnp.float32),        # best cosine
            pltpu.VMEM((blk_b, 1), jnp.int32),          # best class index
        ],
    )

    loss_pe, corr_pe = pl.pallas_call(
        kernel,
        out_shape=(jax.ShapeDtypeStruct((b_pad, 1), jnp.float32),
                   jax.ShapeDtypeStruct((b_pad, 1), jnp.float32)),
        grid_spec=grid_spec,
        compiler_params=pltpu.CompilerParams(
            dimension_semantics=("parallel", "arbitrary"),
            vmem_limit_bytes=vmem_limit),
    )(x_p, w_hat, lab_p)

    loss = jnp.sum(loss_pe[:B, 0]) / B
    acc = jnp.sum(corr_pe[:B, 0]) / B * 100.0
    return loss, acc


def _reference_forward(x, weight, labels, *, m, s=30.0):
    """Pure-JAX mirror of the PyTorch AMLinear.forward (sanity check)."""
    col_norm = jnp.sqrt(jnp.sum(weight * weight, axis=0, keepdims=True))
    ww = weight / jnp.maximum(col_norm, 1e-5)        # renorm(2,1,1e-5).mul(1e5)
    xh = x / jnp.maximum(jnp.sqrt(jnp.sum(x * x, axis=1, keepdims=True)), 1e-12)
    cos = jnp.clip(xh @ ww, -1.0, 1.0)
    one_hot = jax.nn.one_hot(labels, weight.shape[1], dtype=jnp.float32)
    adjust = s * jnp.where(one_hot == 1.0, cos - m, cos)
    logp = jax.nn.log_softmax(adjust, axis=-1)
    loss = -jnp.mean(jnp.sum(one_hot * logp, axis=-1))
    acc = jnp.mean((jnp.argmax(cos, axis=-1) == labels).astype(jnp.float32)) * 100.0
    return loss, acc


if __name__ == "__main__":
    # Small-but-multi-tile shapes: 12 rows (pads to 2 x 8-row B tiles, exercising
    # row masking), 40 features (pads to 128 lanes), 200 classes (pads to
    # 2 x 128-class tiles, exercising class masking + online softmax).
    batch, in_features, n_cls = 12, 40, 200
    margin, scale = 0.35, 30.0

    key = jax.random.PRNGKey(0)
    kx, kw, kl = jax.random.split(key, 3)
    x = jax.random.normal(kx, (batch, in_features), dtype=jnp.float32)
    weight = jax.random.uniform(kw, (in_features, n_cls), dtype=jnp.float32,
                                minval=-1.0, maxval=1.0)
    labels = jax.random.randint(kl, (batch,), 0, n_cls, dtype=jnp.int32)

    loss, acc = am_linear_forward(x, weight, labels, m=margin, s=scale,
                                  block_b=8, block_c=128)
    loss = jax.block_until_ready(loss)
    acc = jax.block_until_ready(acc)

    ref_loss, ref_acc = _reference_forward(x, weight, labels, m=margin, s=scale)
    assert jnp.allclose(loss, ref_loss, rtol=1e-4, atol=1e-5), (loss, ref_loss)
    assert jnp.allclose(acc, ref_acc, rtol=1e-5, atol=1e-3), (acc, ref_acc)

    print("KERNEL_OK")
</pallas_src>

<mosaic_0001>
module attributes {stable_mosaic.version = 11 : i64} {
  func.func @_wnorm_kernel(%arg0: i32, %arg1: memref<128x128xf32, #tpu.memory_space<vmem>>, %arg2: memref<128x128xf32, #tpu.memory_space<vmem>>) attributes {dimension_semantics = [#tpu.dimension_semantics<parallel>], iteration_bounds = array<i64: 2>, scalar_prefetch = 0 : i64, scratch_operands = 0 : i64, tpu.core_type = #tpu.core_type<tc>, window_params = [{transform_indices = @transform_0, window_bounds = array<i64: 128, 128>}, {transform_indices = @transform_1, window_bounds = array<i64: 128, 128>}]} {
    %c0 = arith.constant 0 : index
    %c0_0 = arith.constant 0 : index
    %0 = vector.load %arg1[%c0, %c0_0] : memref<128x128xf32, #tpu.memory_space<vmem>>, vector<128x128xf32>
    %1 = arith.mulf %0, %0 : vector<128x128xf32>
    %cst = arith.constant dense<0.000000e+00> : vector<128xf32>
    %2 = vector.multi_reduction <add>, %1, %cst [0] : vector<128x128xf32> to vector<128xf32>
    %3 = vector.shape_cast %2 : vector<128xf32> to vector<1x128xf32>
    %4 = math.sqrt %3 : vector<1x128xf32>
    %cst_1 = arith.constant 9.99999974E-6 : f32
    %5 = vector.broadcast %cst_1 : f32 to vector<1x128xf32>
    %6 = arith.maximumf %4, %5 : vector<1x128xf32>
    %7 = vector.broadcast %6 : vector<1x128xf32> to vector<128x128xf32>
    %8 = arith.divf %0, %7 : vector<128x128xf32>
    %c0_2 = arith.constant 0 : index
    %c0_3 = arith.constant 0 : index
    %9 = vector.load %arg2[%c0_2, %c0_3] : memref<128x128xf32, #tpu.memory_space<vmem>>, vector<128x128xf32>
    tpu.vector_store %arg2[%c0_2, %c0_3], %8 {strides = array<i32>} : memref<128x128xf32, #tpu.memory_space<vmem>>, vector<128x128xf32>,
    return
  }
  func.func @transform_0(%arg0: i32) -> (i32, i32) {
    %c0_i32 = arith.constant 0 : i32
    %c0_i32_0 = arith.constant 0 : i32
    return %c0_i32, %arg0 : i32, i32
  }
  func.func @transform_1(%arg0: i32) -> (i32, i32) {
    %c0_i32 = arith.constant 0 : i32
    %c0_i32_0 = arith.constant 0 : i32
    return %c0_i32, %arg0 : i32, i32
  }
}

</mosaic_0001>

<llo_original>
// kernel: tpu_custom_call.1
$region0: #{tpu_custom_call.1}
  #allocation0 [shape = 'u32[]', space=smem, size = 0x4, offset = 0x4, fixed_abs, tag = 'smem constant byte address 0x4 - core index']
  #allocation1 [shape = 'u32[72,128]{1,0:T(1,128)}', space=vmem, size = 0x9000, scoped, tag = 'internal scratch']
  %s0 = inlined_call_operand.hbm [shape: f32[128,256], index: 0, kind: input, shape index: {}]
  %s1 = inlined_call_operand.hbm [shape: f32[128,256], index: 1, kind: output, shape index: {}]
  %s2 = sld [smem:[#allocation0]]
  $region41: #{tpu_custom_call.1} parent=0
    _
  %s4 = ssub.s32 1, %s2
  %s5 = scalar_select 0, %s4, %s2
  $region1: #{tpu_custom_call.1} parent=0
    #allocation2 [shape = 'u8[131072]{0}', space=vmem, size = 0x20000, scoped, tag = 'input window, operand 0']
    #allocation3 [shape = 's32[2]{0}', space=sflag, size = 0x8, scoped, tag = 'scoped memory for tpu_custom_call.1']
    #allocation4 [shape = 's32[2]{0}', space=sflag, size = 0x8, scoped, tag = 'scoped memory for tpu_custom_call.1']
    #allocation5 [shape = 'u8[131072]{0}', space=vmem, size = 0x20000, scoped, tag = 'output window, operand 0']
    %6 = vsyncpa [#allocation3], 0
    %s7 = scalar_lea.sflag [#allocation3], 1
    %8 = vsyncpa %s7, 0
    %9 = vsyncpa [#allocation4], 0
    %s10 = scalar_lea.sflag [#allocation4], 1
    %11 = vsyncpa %s10, 0
    loop: start=0, step=1, limit=4
    $region2: #{tpu_custom_call.1} parent=1 // loop_pre_header
      _
    $region3: #{tpu_custom_call.1} parent=1 // loop_header
      %s13 = sphi 0, %s17
      %p14 = scmp.ge.s32.totalorder %s13, 4
      %s23 = sphi 0, %s25
      %s26 = sphi 0, %s23
      %s27 = sphi 0, %s26
      %s43 = sphi 0, %s27
      %s49 = sphi 0, %s51
      %s52 = sphi 0, %s49
      %s53 = sphi 0, %s52
      %s69 = sphi 0, %s53
    $region4: #{tpu_custom_call.1} parent=1 // loop_header_branch
      %16 = sbr.rel (%p14) target = $region8
    $region5: #{tpu_custom_call.1} parent=1 // loop_body
      %s18 = ssub.s32 %s13, 1
      %s19 = ssub.s32 %s13, 2
      %s20 = sadd.s32 %s13, 1
      %s21 = ssub.s32 %s13, %s20
      %p22 = scmp.eq.s32.totalorder %s21, 0
      %s24 = sadd.s32 %s23, 1
      %s25 = scalar_select %p22, %s23, %s24
      %p28 = pneg %p22
      %p29 = scmp.eq.s32.totalorder %s13, 1
      %p30 = por %p28, %p29
      %p31 = scmp.ne.s32.totalorder %s23, %s26
      %p32 = scmp.eq.s32.totalorder %s13, 0
      %p33 = por %p31, %p32
      %p34 = scmp.ne.s32.totalorder %s23, %s26
      %p35 = scmp.eq.s32.totalorder %s18, 1
      %p36 = por %p34, %p35
      %p37 = scmp.ne.s32.totalorder %s26, %s27
      %p38 = scmp.eq.s32.totalorder %s18, 0
      %p39 = por %p37, %p38
      %p40 = scmp.ne.s32.totalorder %s26, %s27
      %p41 = scmp.eq.s32.totalorder %s19, 1
      %p42 = por %p40, %p41
      %p44 = scmp.ne.s32.totalorder %s27, %s43
      %p45 = scmp.eq.s32.totalorder %s19, 0
      %p46 = por %p44, %p45
      %s47 = ssub.s32 %s13, %s20
      %p48 = scmp.eq.s32.totalorder %s47, 0
      %s50 = sadd.s32 %s49, 1
      %s51 = scalar_select %p48, %s49, %s50
      %p54 = pneg %p48
      %p55 = scmp.eq.s32.totalorder %s13, 1
      %p56 = por %p54, %p55
      %p57 = scmp.ne.s32.totalorder %s49, %s52
      %p58 = scmp.eq.s32.totalorder %s13, 0
      %p59 = por %p57, %p58
      %p60 = scmp.ne.s32.totalorder %s49, %s52
      %p61 = scmp.eq.s32.totalorder %s18, 1
      %p62 = por %p60, %p61
      %p63 = scmp.ne.s32.totalorder %s52, %s53
      %p64 = scmp.eq.s32.totalorder %s18, 0
      %p65 = por %p63, %p64
      %p66 = scmp.ne.s32.totalorder %s52, %s53
      %p67 = scmp.eq.s32.totalorder %s19, 1
      %p68 = por %p66, %p67
      %p70 = scmp.ne.s32.totalorder %s53, %s69
      %p71 = scmp.eq.s32.totalorder %s19, 0
      %p72 = por %p70, %p71
      %p73 = scmp.le.s32.totalorder 1, %s13
      %p74 = scmp.lt.s32.totalorder %s13, 3
      %p75 = pnand %p73, %p74
      %p76 = pneg %p75
      // Predicated region
      $region9: #{tpu_custom_call.1} parent=5 // pred_check
        _
      $region10: #{tpu_custom_call.1} parent=5 // pred_check_branch
        %78 = sbr.rel (%p75) target = $region12
      $region11: #{tpu_custom_call.1} parent=5 // pred_region
        %s79 = ssub.s32 %s13, 1
      $region12: #{tpu_custom_call.1} parent=5 // pred_fallthru
        _
      %p80 = scmp.lt.s32.totalorder %s13, 2
      // Predicated region
      $region13: #{tpu_custom_call.1} parent=5 // pred_check
        %p81 = pneg %p80
      $region14: #{tpu_custom_call.1} parent=5 // pred_check_branch
        %83 = sbr.rel (%p81) target = $region16
      $region15: #{tpu_custom_call.1} parent=5 // pred_region
        // Predicated region
        $region17: #{tpu_custom_call.1} parent=15 // pred_check
          %p84 = pneg %p33
        $region18: #{tpu_custom_call.1} parent=15 // pred_check_branch
          %86 = sbr.rel (%p84) target = $region20
        $region19: #{tpu_custom_call.1} parent=15 // pred_region
          %s87 = sand.u32 %s23, 1
          %s88 = scalar_lea.sflag [#allocation3], %s87
          %s89 = sand.u32 %s23, 1
          %s90 = smul.addr %s89, 128
          %s91 = scalar_lea.vmem [#allocation2], %s90
          %93 = vsyncadd %s88, 0
          %s94 = smul.addr %s13, 8
          %s95 = scalar_lea.hbm %s0, %s94
          %s96 = sshll.u32 %s95, 4
          %s97 = int_to_ptr.hbm [resolvable:$true] %s96
          %s98 = sshll.u32 %s91, 4
          %s99 = int_to_ptr.vmem [resolvable:$true] %s98
          %104 = dma.hbm_to_vmem [thread:$0]  %s97, 2048, %s99, %s88, 256, 128, 8
        $region20: #{tpu_custom_call.1} parent=15 // pred_fallthru
          _
      $region16: #{tpu_custom_call.1} parent=5 // pred_fallthru
        _
      %p105 = scmp.le.s32.totalorder 1, %s13
      %p106 = scmp.lt.s32.totalorder %s13, 3
      %p107 = pnand %p105, %p106
      %p108 = pneg %p107
      // Predicated region
      $region21: #{tpu_custom_call.1} parent=5 // pred_check
        _
      $region22: #{tpu_custom_call.1} parent=5 // pred_check_branch
        %110 = sbr.rel (%p107) target = $region24
      $region23: #{tpu_custom_call.1} parent=5 // pred_region
        %s111 = ssub.s32 %s13, 1
        %s112 = sand.u32 %s26, 1
        %s113 = scalar_lea.sflag [#allocation3], %s112
        %s114 = sand.u32 %s26, 1
        %s115 = smul.addr %s114, 128
        %s116 = scalar_lea.vmem [#allocation2], %s115
        // Predicated region
        $region25: #{tpu_custom_call.1} parent=23 // pred_check
          %p117 = pneg %p39
        $region26: #{tpu_custom_call.1} parent=23 // pred_check_branch
          %119 = sbr.rel (%p117) target = $region28
        $region27: #{tpu_custom_call.1} parent=23 // pred_region
          %121 = dma.done %s113, 2048
        $region28: #{tpu_custom_call.1} parent=23 // pred_fallthru
          _
        %s122 = sand.u32 %s26, 1
        %s123 = scalar_lea.sflag [#allocation3], %s122
        %s124 = sand.u32 %s26, 1
        %s125 = smul.addr %s124, 128
        %s126 = scalar_lea.vmem [#allocation2], %s125
        %p127 = pneg %p39
        %p128 = pneg %p36
        %p129 = pneg %p65
        %p130 = pneg %p62
        %s131 = sand.u32 %s52, 1
        %s132 = scalar_lea.sflag [#allocation4], %s131
        %s133 = sand.u32 %s52, 1
        %s134 = smul.addr %s133, 128
        %s135 = scalar_lea.vmem [#allocation5], %s134
        %v136 = vld [vmem:[%s116] sm:$0xff]
        %v137 = vld [vmem:[%s116 + $0x8] sm:$0xff]
        %v138 = vld [vmem:[%s116 + $0x10] sm:$0xff]
        %v139 = vld [vmem:[%s116 + $0x18] sm:$0xff]
        %v140 = vld [vmem:[%s116 + $0x20] sm:$0xff]
        %v141 = vld [vmem:[%s116 + $0x28] sm:$0xff]
        %v142 = vld [vmem:[%s116 + $0x30] sm:$0xff]
        %v143 = vld [vmem:[%s116 + $0x38] sm:$0xff]
        %v144 = vld [vmem:[%s116 + $0x40] sm:$0xff]
        %v145 = vld [vmem:[%s116 + $0x48] sm:$0xff]
        %v146 = vld [vmem:[%s116 + $0x50] sm:$0xff]
        %v147 = vld [vmem:[%s116 + $0x58] sm:$0xff]
        %v148 = vld [vmem:[%s116 + $0x60] sm:$0xff]
        %v149 = vld [vmem:[%s116 + $0x68] sm:$0xff]
        %v150 = vld [vmem:[%s116 + $0x70] sm:$0xff]
        %v151 = vld [vmem:[%s116 + $0x78] sm:$0xff]
        %v152 = vmul.f32 %v136, %v136
        %v153 = vmul.f32 %v137, %v137
        %v154 = vmul.f32 %v138, %v138
        %v155 = vmul.f32 %v139, %v139
        %v156 = vmul.f32 %v140, %v140
        %v157 = vmul.f32 %v141, %v141
        %v158 = vmul.f32 %v142, %v142
        %v159 = vmul.f32 %v143, %v143
        %v160 = vmul.f32 %v144, %v144
        %v161 = vmul.f32 %v145, %v145
        %v162 = vmul.f32 %v146, %v146
        %v163 = vmul.f32 %v147, %v147
        %v164 = vmul.f32 %v148, %v148
        %v165 = vmul.f32 %v149, %v149
        %v166 = vmul.f32 %v150, %v150
        %v167 = vmul.f32 %v151, %v151
        %v168 = vadd.f32 %v152, %v153
        %v169 = vadd.f32 %v168, %v154
        %v170 = vadd.f32 %v169, %v155
        %v171 = vadd.f32 %v170, %v156
        %v172 = vadd.f32 %v171, %v157
        %v173 = vadd.f32 %v172, %v158
        %v174 = vadd.f32 %v173, %v159
        %v175 = vadd.f32 %v174, %v160
        %v176 = vadd.f32 %v175, %v161
        %v177 = vadd.f32 %v176, %v162
        %v178 = vadd.f32 %v177, %v163
        %v179 = vadd.f32 %v178, %v164
        %v180 = vadd.f32 %v179, %v165
        %v181 = vadd.f32 %v180, %v166
        %v182 = vadd.f32 %v181, %v167
        %v183 = vrot.slane %v182, 4
        %v184 = vadd.f32 %v182, %v183
        %v185 = vrot.slane %v184, 2
        %v186 = vadd.f32 %v184, %v185
        %v187 = vrot.slane %v186, 1
        %v188 = vadd.f32 %v186, %v187
        %v189 = vrsqrt.pop %v188
        %v190 = vmul.f32 %v189, %v188
        %v191 = vmul.f32 %v190, %v189
        %v192 = vmul.f32 0.5, %v191
        %v193 = vsub.f32 1.5, %v192
        %v194 = vmul.f32 %v189, %v193
        %v195 = vmul.f32 %v188, %v194
        %vm196 = vcmp.eq.f32.partialorder %v188, inf
        %v197 = vsel %vm196, %v188, %v195
        %vm198 = vcmp.eq.f32.partialorder %v188, 0.0
        %v199 = vand.u32 %v188, 2147483648
        %v200 = vsel %vm198, %v199, %v197
        %v201 = vmax.f32 %v200, 1e-05
        %v202 = vrcp.pop %v201
        %v203 = vmul.f32 %v201, %v202
        %v204 = vsub.f32 1.0, %v203
        %v205 = vmul.f32 %v202, %v204
        %v206 = vadd.f32 %v202, %v205
        %vm207 = vweird.f32 %v201
        %vm208 = vweird.f32 %v202
        %vm209 = vmor %vm207, %vm208
        %v210 = vsel %vm209, %v202, %v206
        %v211 = vand.u32 2147483647, %v201
        %vm212 = vcmp.eq.f32.partialorder %v211, 8.507059e+37
        %v213 = vand.u32 %v201, 2147483648
        %v214 = vor.u32 1.1754944e-38, %v213
        %v215 = vsel %vm212, %v214, %v210
        %v216 = vmul.f32 %v136, %v215
        %v217 = vmul.f32 %v137, %v215
        %v218 = vmul.f32 %v138, %v215
        %v219 = vmul.f32 %v139, %v215
        %v220 = vmul.f32 %v140, %v215
        %v221 = vmul.f32 %v141, %v215
        %v222 = vmul.f32 %v142, %v215
        %v223 = vmul.f32 %v143, %v215
        %v224 = vmul.f32 %v144, %v215
        %v225 = vmul.f32 %v145, %v215
        %v226 = vmul.f32 %v146, %v215
        %v227 = vmul.f32 %v147, %v215
        %v228 = vmul.f32 %v148, %v215
        %v229 = vmul.f32 %v149, %v215
        %v230 = vmul.f32 %v150, %v215
        %v231 = vmul.f32 %v151, %v215
        %232 = vst [vmem:[%s135] sm:$0xff] %v216
        %233 = vst [vmem:[%s135 + $0x8] sm:$0xff] %v217
        %234 = vst [vmem:[%s135 + $0x10] sm:$0xff] %v218
        %235 = vst [vmem:[%s135 + $0x18] sm:$0xff] %v219
        %236 = vst [vmem:[%s135 + $0x20] sm:$0xff] %v220
        %237 = vst [vmem:[%s135 + $0x28] sm:$0xff] %v221
        %238 = vst [vmem:[%s135 + $0x30] sm:$0xff] %v222
        %239 = vst [vmem:[%s135 + $0x38] sm:$0xff] %v223
        %240 = vst [vmem:[%s135 + $0x40] sm:$0xff] %v224
        %241 = vst [vmem:[%s135 + $0x48] sm:$0xff] %v225
        %242 = vst [vmem:[%s135 + $0x50] sm:$0xff] %v226
        %243 = vst [vmem:[%s135 + $0x58] sm:$0xff] %v227
        %244 = vst [vmem:[%s135 + $0x60] sm:$0xff] %v228
        %245 = vst [vmem:[%s135 + $0x68] sm:$0xff] %v229
        %246 = vst [vmem:[%s135 + $0x70] sm:$0xff] %v230
        %247 = vst [vmem:[%s135 + $0x78] sm:$0xff] %v231
        %s248 = sand.u32 %s52, 1
        %s249 = scalar_lea.sflag [#allocation4], %s248
        %s250 = sand.u32 %s52, 1
        %s251 = smul.addr %s250, 128
        %s252 = scalar_lea.vmem [#allocation5], %s251
        // Predicated region
        $region29: #{tpu_custom_call.1} parent=23 // pred_check
          %p253 = pneg %p62
        $region30: #{tpu_custom_call.1} parent=23 // pred_check_branch
          %255 = sbr.rel (%p253) target = $region32
        $region31: #{tpu_custom_call.1} parent=23 // pred_region
          %257 = vsyncadd %s249, 0
          %s258 = smul.addr %s18, 8
          %s259 = scalar_lea.hbm %s1, %s258
          %s260 = sshll.u32 %s252, 4
          %s261 = int_to_ptr.vmem [resolvable:$true] %s260
          %s262 = sshll.u32 %s259, 4
          %s263 = int_to_ptr.hbm [resolvable:$true] %s262
          %268 = dma.vmem_to_hbm [thread:$0]  %s261, 2048, %s263, %s249, 128, 256, 8
        $region32: #{tpu_custom_call.1} parent=23 // pred_fallthru
          _
      $region24: #{tpu_custom_call.1} parent=5 // pred_fallthru
        _
      %p269 = scmp.le.s32.totalorder 2, %s13
      // Predicated region
      $region33: #{tpu_custom_call.1} parent=5 // pred_check
        %p270 = pneg %p269
      $region34: #{tpu_custom_call.1} parent=5 // pred_check_branch
        %272 = sbr.rel (%p270) target = $region36
      $region35: #{tpu_custom_call.1} parent=5 // pred_region
        %s273 = ssub.s32 %s13, 2
        // Predicated region
        $region37: #{tpu_custom_call.1} parent=35 // pred_check
          %p274 = pneg %p68
        $region38: #{tpu_custom_call.1} parent=35 // pred_check_branch
          %276 = sbr.rel (%p274) target = $region40
        $region39: #{tpu_custom_call.1} parent=35 // pred_region
          %s277 = sand.u32 %s53, 1
          %s278 = scalar_lea.sflag [#allocation4], %s277
          %s279 = sand.u32 %s53, 1
          %s280 = smul.addr %s279, 128
          %s281 = scalar_lea.vmem [#allocation5], %s280
          %283 = dma.done %s278, 2048
        $region40: #{tpu_custom_call.1} parent=35 // pred_fallthru
          _
      $region36: #{tpu_custom_call.1} parent=5 // pred_fallthru
        _
    $region6: #{tpu_custom_call.1} parent=1 // loop_footer
      %s17 = sadd.s32 1, %s13
    $region7: #{tpu_custom_call.1} parent=1 // loop_footer_branch
      %12 = sbr.rel target = $region3
    $region8: #{tpu_custom_call.1} parent=1 // loop_exit
      _
    %284 = vsyncpa [#allocation3], 1
    %s285 = scalar_lea.sflag [#allocation3], 1
    %286 = vsyncpa %s285, 1
    %287 = vsyncpa [#allocation4], 1
    %s288 = scalar_lea.sflag [#allocation4], 1
    %289 = vsyncpa %s288, 1

</llo_original>
